<compile_context>
chip_gen: v6e
topology: v6e:2x2x1
jax: 0.10.0
libtpu: 0.0.40
codegen_flags: <defaults>
</compile_context>

<pallas_src>
import jax
import jax.numpy as jnp
from jax.experimental import pallas as pl
from jax.experimental.pallas import tpu as pltpu


def _binrot_kernel(data_ref, out_ref):
    # data_ref : VMEM (16, N) f32, rows:
    #   0..7  : gathered logits x[:, 0:8]   (transposed: channel-major, N on lanes)
    #   8     : mask
    #   9, 10 : rotbin[:, 0], rotbin[:, 1]  (cast to f32)
    #   11,12 : sin(rotres[:,0]), cos(rotres[:,0])
    #   13,14 : sin(rotres[:,1]), cos(rotres[:,1])
    #   15    : zero pad (sublane alignment)
    # out_ref : VMEM (1, 1) f32 scalar loss
    d = data_ref[...]
    n = d.shape[1]
    inv_n = 1.0 / n                      # static Python constant

    m = d[8:9]                           # (1, N)
    tb0, tb1 = d[9:10], d[10:11]

    # torch compute_bin_loss masks the *logits*, not the per-row loss.
    xm0, xm1 = d[0:1] * m, d[1:2] * m    # bin-1 masked logits
    xm4, xm5 = d[4:5] * m, d[5:6] * m    # bin-2 masked logits

    def ce_rows(l0, l1, tgt):
        # Per-row 2-class cross entropy: logsumexp(l0, l1) - l_target.
        mx = jnp.maximum(l0, l1)
        mn = jnp.minimum(l0, l1)
        lse = mx + jnp.log(1.0 + jnp.exp(mn - mx))   # arg in [1, 2]: safe
        picked = jnp.where(tgt == 0.0, l0, l1)
        return lse - picked                          # (1, N)

    ce1 = ce_rows(xm0, xm1, tb0)
    ce2 = ce_rows(xm4, xm5, tb1)

    def smooth_l1(x):
        ax = jnp.abs(x)
        return jnp.where(ax < 1.0, 0.5 * x * x, ax - 0.5)

    v1 = (tb0 != 0.0).astype(jnp.float32)
    v2 = (tb1 != 0.0).astype(jnp.float32)
    res1 = v1 * (smooth_l1(d[2:3] - d[11:12]) + smooth_l1(d[3:4] - d[12:13]))
    res2 = v2 * (smooth_l1(d[6:7] - d[13:14]) + smooth_l1(d[7:8] - d[14:15]))

    # One fused lane reduction over all per-row contribution vectors.
    contrib = jnp.concatenate([ce1, ce2, res1, res2, v1, v2], axis=0)   # (6, N)
    s = jnp.sum(contrib, axis=-1, keepdims=True)                        # (6, 1)

    loss = (s[0:1] + s[1:2]) * inv_n \
         + s[2:3] / jnp.maximum(s[4:5], 1.0) \
         + s[3:4] / jnp.maximum(s[5:6], 1.0)                            # (1, 1)
    out_ref[...] = loss


def bin_rot_loss(output, mask, ind, rotbin, rotres):
    """output: (B, 8, H, W) logits; mask: (B, K); ind: (B, K) int;
    rotbin: (B, K, 2) int; rotres: (B, K, 2) float. Returns scalar loss."""
    B, C, H, W = output.shape
    K = ind.shape[1]
    HW = H * W
    N = B * K

    # Gather directly from the untransposed (B, C, HW) layout: only the K
    # indexed positions per batch are read; no full-map transpose is ever
    # materialized. Result is reshaped channel-major -> (8, N) (lane-dense).
    feat = output.reshape(B, C, HW)
    pred = jnp.take_along_axis(feat, ind[:, None, :].astype(jnp.int32), axis=2)  # (B, C, K)
    pred = jnp.transpose(pred, (1, 0, 2)).reshape(C, N).astype(jnp.float32)      # (8, N), b-major rows

    m = mask.reshape(1, N).astype(jnp.float32)
    tbf = rotbin.astype(jnp.float32)
    tb0 = tbf[..., 0].reshape(1, N)
    tb1 = tbf[..., 1].reshape(1, N)
    tr = rotres.astype(jnp.float32)
    sn = jnp.sin(tr)
    cs = jnp.cos(tr)
    sn0, cs0 = sn[..., 0].reshape(1, N), cs[..., 0].reshape(1, N)
    sn1, cs1 = sn[..., 1].reshape(1, N), cs[..., 1].reshape(1, N)
    pad = jnp.zeros((1, N), jnp.float32)

    data = jnp.concatenate(
        [pred, m, tb0, tb1, sn0, cs0, sn1, cs1, pad], axis=0)   # (16, N) single packed block

    out = pl.pallas_call(
        _binrot_kernel,
        out_shape=jax.ShapeDtypeStruct((1, 1), jnp.float32),
        grid=(1,),
        in_specs=[pl.BlockSpec((16, N), lambda i: (0, 0))],
        out_specs=pl.BlockSpec((1, 1), lambda i: (0, 0)),
        compiler_params=pltpu.CompilerParams(
            dimension_semantics=("arbitrary",)),
    )(data)
    return out.reshape(())


def _reference(output, mask, ind, rotbin, rotres):
    B, C, H, W = output.shape
    feat = jnp.transpose(output, (0, 2, 3, 1)).reshape(B, H * W, C)
    pred = jnp.take_along_axis(feat, ind[:, :, None], axis=1)     # (B, K, 8)
    x = pred.reshape(-1, 8)
    tb = rotbin.reshape(-1, 2)
    tr = rotres.reshape(-1, 2)
    m = mask.reshape(-1, 1).astype(jnp.float32)

    def ce_mean(logits, tgt):
        lse = jax.nn.logsumexp(logits, axis=1)
        picked = jnp.take_along_axis(logits, tgt[:, None], axis=1)[:, 0]
        return jnp.mean(lse - picked)

    xm = x * m
    l_bin1 = ce_mean(xm[:, 0:2], tb[:, 0])
    l_bin2 = ce_mean(xm[:, 4:6], tb[:, 1])

    def sl1(d):
        ad = jnp.abs(d)
        return jnp.where(ad < 1.0, 0.5 * d * d, ad - 0.5)

    def res_branch(ps, pc, ang, valid):
        den = jnp.maximum(jnp.sum(valid), 1.0)
        return (jnp.sum(valid * sl1(ps - jnp.sin(ang))) +
                jnp.sum(valid * sl1(pc - jnp.cos(ang)))) / den

    v1 = (tb[:, 0] != 0).astype(jnp.float32)
    v2 = (tb[:, 1] != 0).astype(jnp.float32)
    l_res = res_branch(x[:, 2], x[:, 3], tr[:, 0], v1) + \
            res_branch(x[:, 6], x[:, 7], tr[:, 1], v2)
    return l_bin1 + l_bin2 + l_res


if __name__ == "__main__":
    B, C, H, W, K = 2, 8, 16, 16, 8
    key = jax.random.PRNGKey(0)
    k1, k2, k3, k4, k5 = jax.random.split(key, 5)

    output = jax.random.normal(k1, (B, C, H, W), dtype=jnp.float32)
    ind = jax.random.randint(k2, (B, K), 0, H * W, dtype=jnp.int32)
    rotbin = jax.random.randint(k3, (B, K, 2), 0, 2, dtype=jnp.int32)
    rotres = jax.random.uniform(k4, (B, K, 2), minval=-3.14, maxval=3.14,
                                dtype=jnp.float32)
    mask = (jax.random.uniform(k5, (B, K)) > 0.3).astype(jnp.float32)

    loss = bin_rot_loss(output, mask, ind, rotbin, rotres)
    jax.block_until_ready(loss)

    ref = _reference(output, mask, ind, rotbin, rotres)
    assert jnp.allclose(loss, ref, rtol=1e-5, atol=1e-5), (loss, ref)
    print("KERNEL_OK")
</pallas_src>

<mosaic_0001>
module attributes {stable_mosaic.version = 11 : i64} {
  func.func @_binrot_kernel(%arg0: i32, %arg1: memref<16x16xf32, #tpu.memory_space<vmem>>, %arg2: memref<1x1xf32, #tpu.memory_space<vmem>>) attributes {dimension_semantics = [#tpu.dimension_semantics<arbitrary>], iteration_bounds = array<i64: 1>, scalar_prefetch = 0 : i64, scratch_operands = 0 : i64, tpu.core_type = #tpu.core_type<tc>, window_params = [{pipeline_mode = #tpu.pipeline_mode<synchronous>, transform_indices = @transform_0, window_bounds = array<i64: 16, 16>}, {pipeline_mode = #tpu.pipeline_mode<synchronous>, transform_indices = @transform_1, window_bounds = array<i64: 1, 1>}]} {
    %c0 = arith.constant 0 : index
    %c0_0 = arith.constant 0 : index
    %0 = vector.load %arg1[%c0, %c0_0] : memref<16x16xf32, #tpu.memory_space<vmem>>, vector<16x16xf32>
    %1 = vector.extract_strided_slice %0 {offsets = [8, 0], sizes = [1, 16], strides = [1, 1]} : vector<16x16xf32> to vector<1x16xf32>
    %2 = vector.extract_strided_slice %0 {offsets = [9, 0], sizes = [1, 16], strides = [1, 1]} : vector<16x16xf32> to vector<1x16xf32>
    %3 = vector.extract_strided_slice %0 {offsets = [10, 0], sizes = [1, 16], strides = [1, 1]} : vector<16x16xf32> to vector<1x16xf32>
    %4 = vector.extract_strided_slice %0 {offsets = [0, 0], sizes = [1, 16], strides = [1, 1]} : vector<16x16xf32> to vector<1x16xf32>
    %5 = arith.mulf %4, %1 : vector<1x16xf32>
    %6 = vector.extract_strided_slice %0 {offsets = [1, 0], sizes = [1, 16], strides = [1, 1]} : vector<16x16xf32> to vector<1x16xf32>
    %7 = arith.mulf %6, %1 : vector<1x16xf32>
    %8 = vector.extract_strided_slice %0 {offsets = [4, 0], sizes = [1, 16], strides = [1, 1]} : vector<16x16xf32> to vector<1x16xf32>
    %9 = arith.mulf %8, %1 : vector<1x16xf32>
    %10 = vector.extract_strided_slice %0 {offsets = [5, 0], sizes = [1, 16], strides = [1, 1]} : vector<16x16xf32> to vector<1x16xf32>
    %11 = arith.mulf %10, %1 : vector<1x16xf32>
    %12 = arith.maximumf %5, %7 : vector<1x16xf32>
    %13 = arith.minimumf %5, %7 : vector<1x16xf32>
    %14 = arith.subf %13, %12 : vector<1x16xf32>
    %15 = math.exp %14 : vector<1x16xf32>
    %cst = arith.constant 1.000000e+00 : f32
    %16 = vector.broadcast %cst : f32 to vector<1x16xf32>
    %17 = arith.addf %16, %15 : vector<1x16xf32>
    %18 = math.log %17 : vector<1x16xf32>
    %19 = arith.addf %12, %18 : vector<1x16xf32>
    %cst_1 = arith.constant 0.000000e+00 : f32
    %20 = vector.broadcast %cst_1 : f32 to vector<1x16xf32>
    %21 = arith.cmpf oeq, %2, %20 : vector<1x16xf32>
    %22 = arith.select %21, %5, %7 : vector<1x16xi1>, vector<1x16xf32>
    %23 = arith.subf %19, %22 : vector<1x16xf32>
    %24 = arith.maximumf %9, %11 : vector<1x16xf32>
    %25 = arith.minimumf %9, %11 : vector<1x16xf32>
    %26 = arith.subf %25, %24 : vector<1x16xf32>
    %27 = math.exp %26 : vector<1x16xf32>
    %cst_2 = arith.constant 1.000000e+00 : f32
    %28 = vector.broadcast %cst_2 : f32 to vector<1x16xf32>
    %29 = arith.addf %28, %27 : vector<1x16xf32>
    %30 = math.log %29 : vector<1x16xf32>
    %31 = arith.addf %24, %30 : vector<1x16xf32>
    %cst_3 = arith.constant 0.000000e+00 : f32
    %32 = vector.broadcast %cst_3 : f32 to vector<1x16xf32>
    %33 = arith.cmpf oeq, %3, %32 : vector<1x16xf32>
    %34 = arith.select %33, %9, %11 : vector<1x16xi1>, vector<1x16xf32>
    %35 = arith.subf %31, %34 : vector<1x16xf32>
    %cst_4 = arith.constant 0.000000e+00 : f32
    %36 = vector.broadcast %cst_4 : f32 to vector<1x16xf32>
    %37 = arith.cmpf one, %2, %36 : vector<1x16xf32>
    %38 = arith.extui %37 : vector<1x16xi1> to vector<1x16xi32>
    %39 = arith.sitofp %38 : vector<1x16xi32> to vector<1x16xf32>
    %cst_5 = arith.constant 0.000000e+00 : f32
    %40 = vector.broadcast %cst_5 : f32 to vector<1x16xf32>
    %41 = arith.cmpf one, %3, %40 : vector<1x16xf32>
    %42 = arith.extui %41 : vector<1x16xi1> to vector<1x16xi32>
    %43 = arith.sitofp %42 : vector<1x16xi32> to vector<1x16xf32>
    %44 = vector.extract_strided_slice %0 {offsets = [2, 0], sizes = [1, 16], strides = [1, 1]} : vector<16x16xf32> to vector<1x16xf32>
    %45 = vector.extract_strided_slice %0 {offsets = [11, 0], sizes = [1, 16], strides = [1, 1]} : vector<16x16xf32> to vector<1x16xf32>
    %46 = arith.subf %44, %45 : vector<1x16xf32>
    %47 = math.absf %46 : vector<1x16xf32>
    %cst_6 = arith.constant 1.000000e+00 : f32
    %48 = vector.broadcast %cst_6 : f32 to vector<1x16xf32>
    %49 = arith.cmpf olt, %47, %48 : vector<1x16xf32>
    %cst_7 = arith.constant 5.000000e-01 : f32
    %50 = vector.broadcast %cst_7 : f32 to vector<1x16xf32>
    %51 = arith.mulf %50, %46 : vector<1x16xf32>
    %52 = arith.mulf %51, %46 : vector<1x16xf32>
    %cst_8 = arith.constant 5.000000e-01 : f32
    %53 = vector.broadcast %cst_8 : f32 to vector<1x16xf32>
    %54 = arith.subf %47, %53 : vector<1x16xf32>
    %55 = arith.select %49, %52, %54 : vector<1x16xi1>, vector<1x16xf32>
    %56 = vector.extract_strided_slice %0 {offsets = [3, 0], sizes = [1, 16], strides = [1, 1]} : vector<16x16xf32> to vector<1x16xf32>
    %57 = vector.extract_strided_slice %0 {offsets = [12, 0], sizes = [1, 16], strides = [1, 1]} : vector<16x16xf32> to vector<1x16xf32>
    %58 = arith.subf %56, %57 : vector<1x16xf32>
    %59 = math.absf %58 : vector<1x16xf32>
    %cst_9 = arith.constant 1.000000e+00 : f32
    %60 = vector.broadcast %cst_9 : f32 to vector<1x16xf32>
    %61 = arith.cmpf olt, %59, %60 : vector<1x16xf32>
    %cst_10 = arith.constant 5.000000e-01 : f32
    %62 = vector.broadcast %cst_10 : f32 to vector<1x16xf32>
    %63 = arith.mulf %62, %58 : vector<1x16xf32>
    %64 = arith.mulf %63, %58 : vector<1x16xf32>
    %cst_11 = arith.constant 5.000000e-01 : f32
    %65 = vector.broadcast %cst_11 : f32 to vector<1x16xf32>
    %66 = arith.subf %59, %65 : vector<1x16xf32>
    %67 = arith.select %61, %64, %66 : vector<1x16xi1>, vector<1x16xf32>
    %68 = arith.addf %55, %67 : vector<1x16xf32>
    %69 = arith.mulf %39, %68 : vector<1x16xf32>
    %70 = vector.extract_strided_slice %0 {offsets = [6, 0], sizes = [1, 16], strides = [1, 1]} : vector<16x16xf32> to vector<1x16xf32>
    %71 = vector.extract_strided_slice %0 {offsets = [13, 0], sizes = [1, 16], strides = [1, 1]} : vector<16x16xf32> to vector<1x16xf32>
    %72 = arith.subf %70, %71 : vector<1x16xf32>
    %73 = math.absf %72 : vector<1x16xf32>
    %cst_12 = arith.constant 1.000000e+00 : f32
    %74 = vector.broadcast %cst_12 : f32 to vector<1x16xf32>
    %75 = arith.cmpf olt, %73, %74 : vector<1x16xf32>
    %cst_13 = arith.constant 5.000000e-01 : f32
    %76 = vector.broadcast %cst_13 : f32 to vector<1x16xf32>
    %77 = arith.mulf %76, %72 : vector<1x16xf32>
    %78 = arith.mulf %77, %72 : vector<1x16xf32>
    %cst_14 = arith.constant 5.000000e-01 : f32
    %79 = vector.broadcast %cst_14 : f32 to vector<1x16xf32>
    %80 = arith.subf %73, %79 : vector<1x16xf32>
    %81 = arith.select %75, %78, %80 : vector<1x16xi1>, vector<1x16xf32>
    %82 = vector.extract_strided_slice %0 {offsets = [7, 0], sizes = [1, 16], strides = [1, 1]} : vector<16x16xf32> to vector<1x16xf32>
    %83 = vector.extract_strided_slice %0 {offsets = [14, 0], sizes = [1, 16], strides = [1, 1]} : vector<16x16xf32> to vector<1x16xf32>
    %84 = arith.subf %82, %83 : vector<1x16xf32>
    %85 = math.absf %84 : vector<1x16xf32>
    %cst_15 = arith.constant 1.000000e+00 : f32
    %86 = vector.broadcast %cst_15 : f32 to vector<1x16xf32>
    %87 = arith.cmpf olt, %85, %86 : vector<1x16xf32>
    %cst_16 = arith.constant 5.000000e-01 : f32
    %88 = vector.broadcast %cst_16 : f32 to vector<1x16xf32>
    %89 = arith.mulf %88, %84 : vector<1x16xf32>
    %90 = arith.mulf %89, %84 : vector<1x16xf32>
    %cst_17 = arith.constant 5.000000e-01 : f32
    %91 = vector.broadcast %cst_17 : f32 to vector<1x16xf32>
    %92 = arith.subf %85, %91 : vector<1x16xf32>
    %93 = arith.select %87, %90, %92 : vector<1x16xi1>, vector<1x16xf32>
    %94 = arith.addf %81, %93 : vector<1x16xf32>
    %95 = arith.mulf %43, %94 : vector<1x16xf32>
    %96 = tpu.concatenate %23, %35, %69, %95, %39, %43 in 0 : vector<1x16xf32>, vector<1x16xf32>, vector<1x16xf32>, vector<1x16xf32>, vector<1x16xf32>, vector<1x16xf32> -> vector<6x16xf32>
    %cst_18 = arith.constant dense<0.000000e+00> : vector<6xf32>
    %97 = vector.multi_reduction <add>, %96, %cst_18 [1] : vector<6x16xf32> to vector<6xf32>
    %98 = vector.shape_cast %97 : vector<6xf32> to vector<6x1xf32>
    %99 = vector.extract_strided_slice %98 {offsets = [0, 0], sizes = [1, 1], strides = [1, 1]} : vector<6x1xf32> to vector<1x1xf32>
    %100 = vector.extract_strided_slice %98 {offsets = [1, 0], sizes = [1, 1], strides = [1, 1]} : vector<6x1xf32> to vector<1x1xf32>
    %101 = arith.addf %99, %100 : vector<1x1xf32>
    %cst_19 = arith.constant 6.250000e-02 : f32
    %102 = vector.broadcast %cst_19 : f32 to vector<1x1xf32>
    %103 = arith.mulf %101, %102 : vector<1x1xf32>
    %104 = vector.extract_strided_slice %98 {offsets = [2, 0], sizes = [1, 1], strides = [1, 1]} : vector<6x1xf32> to vector<1x1xf32>
    %105 = vector.extract_strided_slice %98 {offsets = [4, 0], sizes = [1, 1], strides = [1, 1]} : vector<6x1xf32> to vector<1x1xf32>
    %cst_20 = arith.constant 1.000000e+00 : f32
    %106 = vector.broadcast %cst_20 : f32 to vector<1x1xf32>
    %107 = arith.maximumf %105, %106 : vector<1x1xf32>
    %108 = arith.divf %104, %107 : vector<1x1xf32>
    %109 = arith.addf %103, %108 : vector<1x1xf32>
    %110 = vector.extract_strided_slice %98 {offsets = [3, 0], sizes = [1, 1], strides = [1, 1]} : vector<6x1xf32> to vector<1x1xf32>
    %111 = vector.extract_strided_slice %98 {offsets = [5, 0], sizes = [1, 1], strides = [1, 1]} : vector<6x1xf32> to vector<1x1xf32>
    %cst_21 = arith.constant 1.000000e+00 : f32
    %112 = vector.broadcast %cst_21 : f32 to vector<1x1xf32>
    %113 = arith.maximumf %111, %112 : vector<1x1xf32>
    %114 = arith.divf %110, %113 : vector<1x1xf32>
    %115 = arith.addf %109, %114 : vector<1x1xf32>
    %c0_22 = arith.constant 0 : index
    %c0_23 = arith.constant 0 : index
    %116 = vector.load %arg2[%c0_22, %c0_23] : memref<1x1xf32, #tpu.memory_space<vmem>>, vector<1x1xf32>
    tpu.vector_store %arg2[%c0_22, %c0_23], %115 {strides = array<i32>} : memref<1x1xf32, #tpu.memory_space<vmem>>, vector<1x1xf32>,
    return
  }
  func.func @transform_0(%arg0: i32) -> (i32, i32) {
    %c0_i32 = arith.constant 0 : i32
    %c0_i32_0 = arith.constant 0 : i32
    %c0_i32_1 = arith.constant 0 : i32
    return %c0_i32, %c0_i32_0 : i32, i32
  }
  func.func @transform_1(%arg0: i32) -> (i32, i32) {
    %c0_i32 = arith.constant 0 : i32
    %c0_i32_0 = arith.constant 0 : i32
    %c0_i32_1 = arith.constant 0 : i32
    return %c0_i32, %c0_i32_0 : i32, i32
  }
}

</mosaic_0001>

<llo_original>
// kernel: tpu_custom_call.1
$region0: #{tpu_custom_call.1}
  #allocation0 [shape = 'u32[]', space=smem, size = 0x4, offset = 0x4, fixed_abs, tag = 'smem constant byte address 0x4 - core index']
  #allocation1 [shape = 'u32[144,128]{1,0:T(1,128)}', space=vmem, size = 0x12000, scoped, tag = 'internal scratch']
  %s0 = inlined_call_operand.hbm [shape: f32[16,16], index: 0, kind: input, shape index: {}]
  %s1 = inlined_call_operand.hbm [shape: f32[1,1], index: 1, kind: output, shape index: {}]
  %s2 = sld [smem:[#allocation0]]
  $region18: #{tpu_custom_call.1} parent=0
    _
  %s4 = ssub.s32 1, %s2
  %s5 = scalar_select 0, %s4, %s2
  $region1: #{tpu_custom_call.1} parent=0
    #allocation2 [shape = 'u8[8192]{0}', space=vmem, size = 0x2000, scoped, tag = 'input window, operand 0, single buffered']
    #allocation3 [shape = 's32[1]{0}', space=sflag, size = 0x4, scoped, tag = 'scoped memory for tpu_custom_call.1']
    #allocation4 [shape = 's32[1]{0}', space=sflag, size = 0x4, scoped, tag = 'scoped memory for tpu_custom_call.1']
    #allocation5 [shape = 'u8[512]{0}', space=vmem, size = 0x400, scoped, tag = 'output window, operand 0, single buffered']
    %6 = vsyncpa [#allocation3], 0
    %7 = vsyncpa [#allocation4], 0
    // Predicated region
    $region2: #{tpu_custom_call.1} parent=1 // pred_check
      _
    $region3: #{tpu_custom_call.1} parent=1 // pred_check_branch
      %9 = sbr.rel (0) target = $region5
    $region4: #{tpu_custom_call.1} parent=1 // pred_region
      %s11 = ssub.s32 256, 256
      %12 = vsyncadd [#allocation3], %s11
      %s13 = sshll.u32 [#allocation2], 4
      %s14 = int_to_ptr.vmem [resolvable:$true] %s13
      %19 = dma.hbm_to_vmem [thread:$0]  %s0, 256, %s14, [#allocation3], 128, 128, 8
    $region5: #{tpu_custom_call.1} parent=1 // pred_fallthru
      _
    // Predicated region
    $region6: #{tpu_custom_call.1} parent=1 // pred_check
      _
    $region7: #{tpu_custom_call.1} parent=1 // pred_check_branch
      %21 = sbr.rel (0) target = $region9
    $region8: #{tpu_custom_call.1} parent=1 // pred_region
      %22 = dma.done [#allocation3], 256
    $region9: #{tpu_custom_call.1} parent=1 // pred_fallthru
      _
    %v23 = vld [vmem:[#allocation2] sm:$0xff]
    %v24 = vld [vmem:[#allocation2 + $0x8] sm:$0xff]
    %v25 = vmul.f32 %v23, %v24
    %v27 = vrot.slane %v24, 7
    %v29 = vmul.f32 %v23, %v27
    %v30 = vrot.slane %v24, 4
    %v32 = vmul.f32 %v23, %v30
    %v33 = vrot.slane %v24, 3
    %v35 = vmul.f32 %v23, %v33
    %v37 = vrot.slane %v29, 1
    %v39 = vmax.f32 %v25, %v37
    %v40 = vmin.f32 %v25, %v37
    %v41 = vsub.f32 %v40, %v39
    %v42 = vmul.f32 %v41, 1.442695
    %v43 = vpow.pop %v42
    %v44 = vadd.f32 %v43, 1.0
    %v45 = vlog2.pop %v44
    %v46 = vmul.f32 %v45, 0.6931472
    %v47 = vadd.f32 %v39, %v46
    %vm48 = vcmp.eq.f32.partialorder %v24, 0.0
    %v50 = vrot.slane %v25, 7
    %v52 = vsel %vm48, %v50, %v29
    %v54 = vrot.slane %v52, 1
    %v56 = vsub.f32 %v47, %v54
    %v58 = vrot.slane %v35, 1
    %v60 = vmax.f32 %v32, %v58
    %v61 = vmin.f32 %v32, %v58
    %v62 = vsub.f32 %v61, %v60
    %v63 = vmul.f32 %v62, 1.442695
    %v64 = vpow.pop %v63
    %v65 = vadd.f32 %v64, 1.0
    %v66 = vlog2.pop %v65
    %v67 = vmul.f32 %v66, 0.6931472
    %v68 = vadd.f32 %v60, %v67
    %v70 = vrot.slane %v32, 2
    %v72 = vrot.slane %v35, 3
    %v74 = vsel %vm48, %v70, %v72
    %v76 = vrot.slane %v74, 6
    %v78 = vsub.f32 %v68, %v76
    %vm79 = vcmp.ne.f32.partialorder %v24, 0.0
    %v80 = vsel %vm79, 1, 0
    %v81 = vcvt.s32.f32 %v80
    %v82 = vrot.slane %v24, 1
    %v84 = vsub.f32 %v23, %v82
    %v85 = vand.u32 2147483647, %v84
    %vm86 = vcmp.lt.f32.partialorder %v85, 1.0
    %v87 = vmul.f32 %v84, 0.5
    %v88 = vmul.f32 %v87, %v84
    %v89 = vsub.f32 %v85, 0.5
    %v90 = vsel %vm86, %v88, %v89
    %v92 = vrot.slane %v90, 1
    %v94 = vadd.f32 %v90, %v92
    %v96 = vrot.slane %v94, 1
    %v98 = vmul.f32 %v81, %v96
    %v99 = vsub.f32 %v23, %v27
    %v100 = vand.u32 2147483647, %v99
    %vm101 = vcmp.lt.f32.partialorder %v100, 1.0
    %v102 = vmul.f32 %v99, 0.5
    %v103 = vmul.f32 %v102, %v99
    %v104 = vsub.f32 %v100, 0.5
    %v105 = vsel %vm101, %v103, %v104
    %v107 = vrot.slane %v105, 1
    %v109 = vadd.f32 %v105, %v107
    %v111 = vrot.slane %v109, 4
    %v113 = vmul.f32 %v81, %v111
    %v115 = vrot.slane %v78, 3
    %v118 = vrot.slane %v98, 7
    %v121 = vrot.slane %v113, 7
    %v124 = vrot.slane %v81, 5
    %vm126 = vcmask 1040384
    %v127 = vsel %vm126, %v56, %v115
    %vm128 = vcmask 1041408
    %v129 = vsel %vm128, %v127, %v118
    %vm130 = vcmask 1042432
    %v131 = vsel %vm130, %v129, %v121
    %vm132 = vcmask 1043456
    %v133 = vsel %vm132, %v131, %v124
    %vm134 = vcmask 1044480
    %v135 = vsel %vm134, %v133, %v124
    %vm136 = vcmask 128000
    %v137 = vsel %vm136, %v135, 0.0
    %138 = vadd.xlane.f32.xlu0 %v137
    %v139 = vpop.xlane.xlu0 %138
    %v141 = vrot.slane %v139, 1
    %v143 = vadd.f32 %v139, %v141
    %v144 = vmul.f32 %v143, 0.0625
    %v145 = vmax.f32 %v139, 1.0
    %v147 = vrot.slane %v145, 2
    %v149 = vrcp.pop %v147
    %v150 = vmul.f32 %v139, %v149
    %v152 = vrot.slane %v150, 2
    %v154 = vadd.f32 %v144, %v152
    %v155 = vrot.slane %v150, 3
    %v157 = vadd.f32 %v154, %v155
    %vm158 = vcmask 0
    %159 = vst.msk [vmem:[#allocation5] sm:$0x1] %vm158, %v157
    // Predicated region
    $region10: #{tpu_custom_call.1} parent=1 // pred_check
      _
    $region11: #{tpu_custom_call.1} parent=1 // pred_check_branch
      %161 = sbr.rel (0) target = $region13
    $region12: #{tpu_custom_call.1} parent=1 // pred_region
      %s163 = ssub.s32 16, 16
      %164 = vsyncadd [#allocation4], %s163
      %s166 = sshll.u32 [#allocation5], 4
      %s167 = int_to_ptr.vmem [resolvable:$true] %s166
      %169 = dma.vmem_to_hbm [thread:$0]  %s167, 16, %s1, [#allocation4]
    $region13: #{tpu_custom_call.1} parent=1 // pred_fallthru
      _
    // Predicated region
    $region14: #{tpu_custom_call.1} parent=1 // pred_check
      _
    $region15: #{tpu_custom_call.1} parent=1 // pred_check_branch
      %171 = sbr.rel (0) target = $region17
    $region16: #{tpu_custom_call.1} parent=1 // pred_region
      %172 = dma.done [#allocation4], 16
    $region17: #{tpu_custom_call.1} parent=1 // pred_fallthru
      _
    %173 = vsyncpa [#allocation3], 1
    %174 = vsyncpa [#allocation4], 1

</llo_original>
